<compile_context>
chip_gen: v5e
topology: v5e:2x2
jax: 0.10.0
libtpu: 0.0.40
codegen_flags: <defaults>
</compile_context>

<pallas_src>
import jax
import jax.numpy as jnp
from jax import lax
from jax.experimental import pallas as pl
from jax.experimental.pallas import tpu as pltpu

EPS = 1e-06
LANES = 128
ACC_SUBLANES = 8                       # f32 accumulator tile (8,128) == one vreg
TARGET_BLOCK_BYTES = 2 * 1024 * 1024   # per input per grid step (double-buffered)
SPLIT_MIN_BLOCKS = 8                   # enable the 2-way core split above this


def _accumulate_block(x_ref, y_ref, acc_ref, g, *, block_rows, valid_rows, need_mask):
    """acc_ref (8,128) += fold(sum of (x-y)^2 over this (block_rows,128) block)."""
    d = x_ref[...].astype(jnp.float32) - y_ref[...].astype(jnp.float32)
    dd = d * d

    def fold(v):
        # (block_rows, 128) -> (8, 128) with vreg-wise elementwise adds only.
        return jnp.sum(
            v.reshape(block_rows // ACC_SUBLANES, ACC_SUBLANES, LANES), axis=0
        )

    if not need_mask:
        acc_ref[...] += fold(dd)
        return

    # Only blocks that extend past `valid_rows` pay the mask; full blocks keep
    # the hot loop at load-sub-mul-add.  Mask is applied to dd (not d) so any
    # garbage (NaN/Inf) in the overhang is selected away.
    is_ragged = (g + 1) * block_rows > valid_rows

    @pl.when(jnp.logical_not(is_ragged))
    def _():
        acc_ref[...] += fold(dd)

    @pl.when(is_ragged)
    def _():
        row_ids = (
            lax.broadcasted_iota(jnp.int32, (block_rows, LANES), 0) + g * block_rows
        )
        acc_ref[...] += fold(jnp.where(row_ids < valid_rows, dd, jnp.float32(0.0)))


def _make_fused_kernel(*, block_rows, valid_rows, need_mask, inv_n):
    """Single-split kernel: accumulate, then fold reduce/div/sqrt into the last step."""

    def kernel(tail_ref, x_ref, y_ref, out_ref, acc_ref):
        i = pl.program_id(0)

        @pl.when(i == 0)
        def _():
            acc_ref[...] = jnp.zeros_like(acc_ref)

        _accumulate_block(
            x_ref, y_ref, acc_ref, i,
            block_rows=block_rows, valid_rows=valid_rows, need_mask=need_mask,
        )

        @pl.when(i == pl.num_programs(0) - 1)
        def _():
            total = jnp.sum(acc_ref[...]) + tail_ref[0, 0]
            out_ref[0, 0] = jnp.sqrt(total * jnp.float32(inv_n) + jnp.float32(EPS))

    return kernel


def _make_split_kernel(*, block_rows, valid_rows, steps_per_split, need_mask):
    """2-way split kernel: each split (TensorCore on v7x) owns one (8,128) partial."""

    def kernel(x_ref, y_ref, part_ref):
        c = pl.program_id(0)
        i = pl.program_id(1)

        @pl.when(i == 0)
        def _():
            part_ref[...] = jnp.zeros_like(part_ref)

        g = c * steps_per_split + i  # global block index (may be a phantom block)
        _accumulate_block(
            x_ref, y_ref, part_ref, g,
            block_rows=block_rows, valid_rows=valid_rows, need_mask=need_mask,
        )

    return kernel


def rmse_loss(x, y):
    """sqrt(mean((x - y)**2) + 1e-6); the reduction runs in a Pallas TPU kernel."""
    assert x.shape == y.shape, (x.shape, y.shape)
    n = int(x.size)
    assert n > 0, "RMSELoss is undefined for empty inputs"

    xf = jnp.ravel(x)
    yf = jnp.ravel(y)
    itemsize = max(jnp.dtype(x.dtype).itemsize, jnp.dtype(y.dtype).itemsize)

    # Split off the sub-128 tail so the bulk never goes through an O(N) pad.
    aligned_n = (n // LANES) * LANES
    if aligned_n == 0:
        # Whole input smaller than one lane row: zero-pad to one (8,128) tile
        # (< 1024 elements, trivially cheap; zero diffs contribute 0 to the sum).
        pad = ACC_SUBLANES * LANES - n
        xf = jnp.pad(xf, (0, pad))
        yf = jnp.pad(yf, (0, pad))
        aligned_n = ACC_SUBLANES * LANES
        tail_n = 0
    else:
        tail_n = n - aligned_n

    if tail_n:
        xt = xf[aligned_n:].astype(jnp.float32)
        yt = yf[aligned_n:].astype(jnp.float32)
        tail_sq = jnp.sum((xt - yt) * (xt - yt), dtype=jnp.float32)
        # TODO(synk): for very large inputs with n % 128 != 0 the prefix slice
        # below may still materialize a copy; a fully copy-free path needs a
        # flat-index mask over manually DMA'd 1-D data.
        xk = xf[:aligned_n]
        yk = yf[:aligned_n]
    else:
        tail_sq = jnp.zeros((), jnp.float32)
        xk = xf
        yk = yf

    rows = aligned_n // LANES
    x2d = xk.reshape(rows, LANES)
    y2d = yk.reshape(rows, LANES)

    # ~TARGET_BLOCK_BYTES per input per step regardless of dtype; block_rows is
    # always a multiple of 8 so the (8,128) accumulator fold stays exact.
    cap_rows = max(ACC_SUBLANES, TARGET_BLOCK_BYTES // (LANES * itemsize))
    block_rows = min(cap_rows, pl.cdiv(rows, ACC_SUBLANES) * ACC_SUBLANES)
    total_blocks = pl.cdiv(rows, block_rows)

    num_splits = 2 if total_blocks >= SPLIT_MIN_BLOCKS else 1
    steps_per_split = pl.cdiv(total_blocks, num_splits)
    # Masking needed iff the rectangular (splits x steps x block_rows) cover
    # overhangs the valid rows (ragged last block and/or phantom block).
    need_mask = (num_splits * steps_per_split * block_rows) != rows

    in_block_bytes = block_rows * LANES * itemsize
    f32_block_bytes = block_rows * LANES * 4
    vmem_limit = int(
        min(48 << 20,
            max(32 << 20, 4 * in_block_bytes + 4 * f32_block_bytes + (2 << 20)))
    )
    cost = pl.CostEstimate(
        flops=3 * n, transcendentals=1, bytes_accessed=2 * n * itemsize
    )

    if num_splits == 1:
        # Fused finalize: one pallas_call produces the loss scalar directly
        # (best latency for the primary small-tensor use case).
        kernel = _make_fused_kernel(
            block_rows=block_rows, valid_rows=rows, need_mask=need_mask,
            inv_n=1.0 / n,
        )
        out = pl.pallas_call(
            kernel,
            out_shape=jax.ShapeDtypeStruct((1, 1), jnp.float32),
            grid=(total_blocks,),
            in_specs=[
                pl.BlockSpec(memory_space=pltpu.MemorySpace.SMEM),  # tail_sq
                pl.BlockSpec((block_rows, LANES), lambda i: (i, 0)),
                pl.BlockSpec((block_rows, LANES), lambda i: (i, 0)),
            ],
            out_specs=pl.BlockSpec(memory_space=pltpu.MemorySpace.SMEM),
            scratch_shapes=[pltpu.VMEM((ACC_SUBLANES, LANES), jnp.float32)],
            compiler_params=pltpu.CompilerParams(
                dimension_semantics=("arbitrary",),
                vmem_limit_bytes=vmem_limit,
            ),
            cost_estimate=cost,
        )(tail_sq.reshape(1, 1), x2d, y2d)
        return out[0, 0]

    # 2-way split: leading "parallel" axis shards across TensorCores on v7x.
    # Phantom blocks (odd block counts) clamp to the last real block in the
    # index_map and are zeroed by the in-kernel mask.
    def in_map(c, i):
        return (jnp.minimum(c * steps_per_split + i, total_blocks - 1), 0)

    kernel = _make_split_kernel(
        block_rows=block_rows, valid_rows=rows,
        steps_per_split=steps_per_split, need_mask=need_mask,
    )
    partial = pl.pallas_call(
        kernel,
        out_shape=jax.ShapeDtypeStruct(
            (num_splits, ACC_SUBLANES, LANES), jnp.float32
        ),
        grid=(num_splits, steps_per_split),
        in_specs=[
            pl.BlockSpec((block_rows, LANES), in_map),
            pl.BlockSpec((block_rows, LANES), in_map),
        ],
        out_specs=pl.BlockSpec(
            (None, ACC_SUBLANES, LANES), lambda c, i: (c, 0, 0)
        ),
        compiler_params=pltpu.CompilerParams(
            dimension_semantics=("parallel", "arbitrary"),
            vmem_limit_bytes=vmem_limit,
        ),
        cost_estimate=cost,
    )(x2d, y2d)

    # Tiny final combine on the (num_splits, 8, 128) partials + tail.
    total = jnp.sum(partial) + tail_sq
    return jnp.sqrt(total / jnp.float32(n) + jnp.float32(EPS))


def _reference(x, y):
    d = x.astype(jnp.float32) - y.astype(jnp.float32)
    return jnp.sqrt(jnp.mean(d * d) + jnp.float32(EPS))


if __name__ == "__main__":
    key = jax.random.PRNGKey(0)

    # Primary case: small NCHW inputs matching the PyTorch module's usage.
    kx, ky, key = jax.random.split(key, 3)
    x = jax.random.normal(kx, (2, 4, 16, 16), dtype=jnp.float32)
    y = jax.random.normal(ky, (2, 4, 16, 16), dtype=jnp.float32)
    loss = rmse_loss(x, y)
    jax.block_until_ready(loss)
    assert jnp.allclose(loss, _reference(x, y), rtol=1e-4, atol=1e-6), (
        loss, _reference(x, y))

    # Extra coverage:
    #   (1,8,144,128)  single-block fused path
    #   (3,5,7,11)     unaligned: overhanging-block mask + wrapper tail sum
    #   (4,8,512,256)  exactly 8 blocks -> 2-way "parallel" split, no masking
    #   (9,512,1024)   9 blocks -> split with clamped phantom block + mask
    for shape in [(1, 8, 144, 128), (3, 5, 7, 11), (4, 8, 512, 256), (9, 512, 1024)]:
        kx, ky, key = jax.random.split(key, 3)
        xa = jax.random.normal(kx, shape, dtype=jnp.float32)
        ya = jax.random.normal(ky, shape, dtype=jnp.float32)
        got = rmse_loss(xa, ya)
        jax.block_until_ready(got)
        want = _reference(xa, ya)
        assert jnp.allclose(got, want, rtol=1e-4, atol=1e-6), (shape, got, want)

    # bf16 inputs exercise the dtype-scaled block sizing (same bytes per step).
    kx, ky, key = jax.random.split(key, 3)
    xb = jax.random.normal(kx, (2, 4, 16, 16), dtype=jnp.bfloat16)
    yb = jax.random.normal(ky, (2, 4, 16, 16), dtype=jnp.bfloat16)
    got = rmse_loss(xb, yb)
    jax.block_until_ready(got)
    assert jnp.allclose(got, _reference(xb, yb), rtol=1e-3, atol=1e-5)

    print("KERNEL_OK")
</pallas_src>

<mosaic_0001>
module attributes {stable_mosaic.version = 11 : i64} {
  func.func @kernel(%arg0: i32, %arg1: memref<1x1xf32, #tpu.memory_space<smem>>, %arg2: memref<16x128xf32, #tpu.memory_space<vmem>>, %arg3: memref<16x128xf32, #tpu.memory_space<vmem>>, %arg4: memref<1x1xf32, #tpu.memory_space<smem>>, %arg5: memref<8x128xf32, #tpu.memory_space<vmem>>) attributes {dimension_semantics = [#tpu.dimension_semantics<arbitrary>], iteration_bounds = array<i64: 1>, scalar_prefetch = 0 : i64, scratch_operands = 1 : i64, tpu.core_type = #tpu.core_type<tc>, window_params = [{transform_indices = @transform_0, window_bounds = array<i64: 1, 1>}, {transform_indices = @transform_1, window_bounds = array<i64: 16, 128>}, {transform_indices = @transform_2, window_bounds = array<i64: 16, 128>}, {transform_indices = @transform_3, window_bounds = array<i64: 1, 1>}]} {
    %c0_i32 = arith.constant 0 : i32
    %0 = arith.cmpi eq, %arg0, %c0_i32 : i32
    %1 = arith.extui %0 : i1 to i32
    %c0_i32_0 = arith.constant 0 : i32
    %2 = arith.cmpi ne, %1, %c0_i32_0 : i32
    scf.if %2 {
      %cst_10 = arith.constant 0.000000e+00 : f32
      %15 = vector.broadcast %cst_10 : f32 to vector<8x128xf32>
      %c0_11 = arith.constant 0 : index
      %c0_12 = arith.constant 0 : index
      %16 = vector.load %arg5[%c0_11, %c0_12] : memref<8x128xf32, #tpu.memory_space<vmem>>, vector<8x128xf32>
      tpu.vector_store %arg5[%c0_11, %c0_12], %15 {strides = array<i32>} : memref<8x128xf32, #tpu.memory_space<vmem>>, vector<8x128xf32>,
    } else {
    }
    %c0 = arith.constant 0 : index
    %c0_1 = arith.constant 0 : index
    %3 = vector.load %arg2[%c0, %c0_1] : memref<16x128xf32, #tpu.memory_space<vmem>>, vector<16x128xf32>
    %c0_2 = arith.constant 0 : index
    %c0_3 = arith.constant 0 : index
    %4 = vector.load %arg3[%c0_2, %c0_3] : memref<16x128xf32, #tpu.memory_space<vmem>>, vector<16x128xf32>
    %5 = arith.subf %3, %4 : vector<16x128xf32>
    %6 = arith.mulf %5, %5 : vector<16x128xf32>
    %c0_4 = arith.constant 0 : index
    %c0_5 = arith.constant 0 : index
    %7 = vector.load %arg5[%c0_4, %c0_5] : memref<8x128xf32, #tpu.memory_space<vmem>>, vector<8x128xf32>
    %8 = vector.shape_cast %6 : vector<16x128xf32> to vector<2x8x128xf32>
    %cst = arith.constant dense<0.000000e+00> : vector<8x128xf32>
    %9 = vector.multi_reduction <add>, %8, %cst [0] : vector<2x8x128xf32> to vector<8x128xf32>
    %10 = arith.addf %7, %9 : vector<8x128xf32>
    %c0_6 = arith.constant 0 : index
    %c0_7 = arith.constant 0 : index
    %11 = vector.load %arg5[%c0_6, %c0_7] : memref<8x128xf32, #tpu.memory_space<vmem>>, vector<8x128xf32>
    tpu.vector_store %arg5[%c0_6, %c0_7], %10 {strides = array<i32>} : memref<8x128xf32, #tpu.memory_space<vmem>>, vector<8x128xf32>,
    %c0_i32_8 = arith.constant 0 : i32
    %12 = arith.cmpi eq, %arg0, %c0_i32_8 : i32
    %13 = arith.extui %12 : i1 to i32
    %c0_i32_9 = arith.constant 0 : i32
    %14 = arith.cmpi ne, %13, %c0_i32_9 : i32
    scf.if %14 {
      %c0_10 = arith.constant 0 : index
      %c0_11 = arith.constant 0 : index
      %15 = vector.load %arg5[%c0_10, %c0_11] : memref<8x128xf32, #tpu.memory_space<vmem>>, vector<8x128xf32>
      %16 = vector.shape_cast %15 : vector<8x128xf32> to vector<1x8x128xf32>
      %cst_12 = arith.constant dense<0.000000e+00> : vector<1xf32>
      %17 = vector.multi_reduction <add>, %16, %cst_12 [1, 2] : vector<1x8x128xf32> to vector<1xf32>
      %18 = vector.shape_cast %17 : vector<1xf32> to vector<1x1x1xf32>
      %19 = vector.extract %18[0, 0, 0] : f32 from vector<1x1x1xf32>
      %c0_13 = arith.constant 0 : index
      %c0_14 = arith.constant 0 : index
      %20 = memref.load %arg1[%c0_13, %c0_14] : memref<1x1xf32, #tpu.memory_space<smem>>
      %21 = arith.addf %19, %20 : f32
      %cst_15 = arith.constant 4.8828125E-4 : f32
      %22 = arith.mulf %21, %cst_15 : f32
      %cst_16 = arith.constant 9.99999997E-7 : f32
      %23 = arith.addf %22, %cst_16 : f32
      %24 = math.sqrt %23 : f32
      %c0_17 = arith.constant 0 : index
      %c0_18 = arith.constant 0 : index
      %25 = memref.load %arg4[%c0_17, %c0_18] : memref<1x1xf32, #tpu.memory_space<smem>>
      memref.store %24, %arg4[%c0_17, %c0_18] : memref<1x1xf32, #tpu.memory_space<smem>>
    } else {
    }
    return
  }
  func.func @transform_0(%arg0: i32) -> (i32, i32) {
    %c0_i32 = arith.constant 0 : i32
    %c0_i32_0 = arith.constant 0 : i32
    %c0_i32_1 = arith.constant 0 : i32
    return %c0_i32, %c0_i32_0 : i32, i32
  }
  func.func @transform_1(%arg0: i32) -> (i32, i32) {
    %c0_i32 = arith.constant 0 : i32
    %c0_i32_0 = arith.constant 0 : i32
    return %arg0, %c0_i32 : i32, i32
  }
  func.func @transform_2(%arg0: i32) -> (i32, i32) {
    %c0_i32 = arith.constant 0 : i32
    %c0_i32_0 = arith.constant 0 : i32
    return %arg0, %c0_i32 : i32, i32
  }
  func.func @transform_3(%arg0: i32) -> (i32, i32) {
    %c0_i32 = arith.constant 0 : i32
    %c0_i32_0 = arith.constant 0 : i32
    %c0_i32_1 = arith.constant 0 : i32
    return %c0_i32, %c0_i32_0 : i32, i32
  }
}

</mosaic_0001>

<llo_original>
// kernel: tpu_custom_call.1
$region0: #{tpu_custom_call.1}
  #allocation0 [shape = 'u32[]', space=smem, size = 0x4, offset = 0x4, fixed_abs, tag = 'smem constant byte address 0x4 - core index']
  #allocation1 [shape = 'u32[72,128]{1,0:T(1,128)}', space=vmem, size = 0x9000, scoped, tag = 'internal scratch']
  #allocation2 [shape = 'f32[8,128]{1,0:T(8,128)}', space=vmem, size = 0x1000, scoped, tag = 'scratch operand']
  #allocation3 [shape = 'f32[1,1]{1,0:T(1,128)S(6)}', space=smem, size = 0x200, scoped, tag = 'scoped memory for tpu_custom_call.1']
  %s0 = inlined_call_operand.<no memory space> [shape: f32[1,1], index: 0, kind: input, shape index: {}]
  %s1 = inlined_call_operand.hbm [shape: f32[16,128], index: 1, kind: input, shape index: {}]
  %s2 = inlined_call_operand.hbm [shape: f32[16,128], index: 2, kind: input, shape index: {}]
  %s3 = inlined_call_operand.hbm [shape: f32[1,1], index: 3, kind: output, shape index: {}]
  %s4 = sld [smem:[#allocation0]]
  $region38: #{tpu_custom_call.1} parent=0
    _
  %s6 = ssub.s32 1, %s4
  %s7 = scalar_select 0, %s6, %s4
  %8 = sst [smem:[#allocation3]] %s0
  $region1: #{tpu_custom_call.1} parent=0
    #allocation4 [shape = 'u8[8192]{0}', space=vmem, size = 0x2000, scoped, tag = 'input window, operand 1, single buffered']
    #allocation5 [shape = 's32[1]{0}', space=sflag, size = 0x4, scoped, tag = 'scoped memory for tpu_custom_call.1']
    #allocation6 [shape = 's32[1]{0}', space=sflag, size = 0x4, scoped, tag = 'scoped memory for tpu_custom_call.1']
    #allocation7 [shape = 'u8[8192]{0}', space=vmem, size = 0x2000, scoped, tag = 'input window, operand 2, single buffered']
    #allocation8 [shape = 's32[1]{0}', space=sflag, size = 0x4, scoped, tag = 'scoped memory for tpu_custom_call.1']
    #allocation9 [shape = 'u8[512]{0}', space=smem, size = 0x200, scoped, tag = 'output window, operand 0, single buffered']
    %9 = vsyncpa [#allocation5], 0
    %10 = vsyncpa [#allocation8], 0
    %11 = vsyncpa [#allocation6], 0
    // Predicated region
    $region2: #{tpu_custom_call.1} parent=1 // pred_check
      _
    $region3: #{tpu_custom_call.1} parent=1 // pred_check_branch
      %13 = sbr.rel (0) target = $region5
    $region4: #{tpu_custom_call.1} parent=1 // pred_region
      _
    $region5: #{tpu_custom_call.1} parent=1 // pred_fallthru
      _
    // Predicated region
    $region6: #{tpu_custom_call.1} parent=1 // pred_check
      _
    $region7: #{tpu_custom_call.1} parent=1 // pred_check_branch
      %15 = sbr.rel (0) target = $region9
    $region8: #{tpu_custom_call.1} parent=1 // pred_region
      %17 = vsyncadd [#allocation5], 0
      %s18 = sshll.u32 %s1, 4
      %s19 = int_to_ptr.hbm [resolvable:$true] %s18
      %s20 = sshll.u32 [#allocation4], 4
      %s21 = int_to_ptr.vmem [resolvable:$true] %s20
      %26 = dma.hbm_to_vmem [thread:$0]  %s19, 256, %s21, [#allocation5], 128, 128, 8
    $region9: #{tpu_custom_call.1} parent=1 // pred_fallthru
      _
    // Predicated region
    $region10: #{tpu_custom_call.1} parent=1 // pred_check
      _
    $region11: #{tpu_custom_call.1} parent=1 // pred_check_branch
      %28 = sbr.rel (0) target = $region13
    $region12: #{tpu_custom_call.1} parent=1 // pred_region
      %30 = vsyncadd [#allocation8], 0
      %s31 = sshll.u32 %s2, 4
      %s32 = int_to_ptr.hbm [resolvable:$true] %s31
      %s33 = sshll.u32 [#allocation7], 4
      %s34 = int_to_ptr.vmem [resolvable:$true] %s33
      %39 = dma.hbm_to_vmem [thread:$0]  %s32, 256, %s34, [#allocation8], 128, 128, 8
    $region13: #{tpu_custom_call.1} parent=1 // pred_fallthru
      _
    // Predicated region
    $region14: #{tpu_custom_call.1} parent=1 // pred_check
      _
    $region15: #{tpu_custom_call.1} parent=1 // pred_check_branch
      %41 = sbr.rel (0) target = $region17
    $region16: #{tpu_custom_call.1} parent=1 // pred_region
      %43 = dma.done [#allocation5], 256
    $region17: #{tpu_custom_call.1} parent=1 // pred_fallthru
      _
    // Predicated region
    $region18: #{tpu_custom_call.1} parent=1 // pred_check
      _
    $region19: #{tpu_custom_call.1} parent=1 // pred_check_branch
      %45 = sbr.rel (0) target = $region21
    $region20: #{tpu_custom_call.1} parent=1 // pred_region
      %47 = dma.done [#allocation8], 256
    $region21: #{tpu_custom_call.1} parent=1 // pred_fallthru
      _
    %p48 = scmp.eq.s32.totalorder 0, 0
    // Predicated region
    $region22: #{tpu_custom_call.1} parent=1 // pred_check
      %p49 = pneg %p48
    $region23: #{tpu_custom_call.1} parent=1 // pred_check_branch
      %51 = sbr.rel (%p49) target = $region25
    $region24: #{tpu_custom_call.1} parent=1 // pred_region
      %52 = vst [vmem:[#allocation2] sm:$0xff] 0.0
    $region25: #{tpu_custom_call.1} parent=1 // pred_fallthru
      _
    %v53 = vld [vmem:[#allocation4] sm:$0xff]
    %v54 = vld [vmem:[#allocation4 + $0x8] sm:$0xff]
    %v55 = vld [vmem:[#allocation7] sm:$0xff]
    %v56 = vld [vmem:[#allocation7 + $0x8] sm:$0xff]
    %v57 = vsub.f32 %v53, %v55
    %v58 = vsub.f32 %v54, %v56
    %v59 = vmul.f32 %v57, %v57
    %v60 = vmul.f32 %v58, %v58
    %v61 = vld [vmem:[#allocation2] sm:$0xff]
    %v62 = vadd.f32 %v59, %v60
    %v63 = vadd.f32 %v61, %v62
    %64 = vst [vmem:[#allocation2] sm:$0xff] %v63
    // Predicated region
    $region26: #{tpu_custom_call.1} parent=1 // pred_check
      %p65 = pneg %p48
    $region27: #{tpu_custom_call.1} parent=1 // pred_check_branch
      %67 = sbr.rel (%p65) target = $region29
    $region28: #{tpu_custom_call.1} parent=1 // pred_region
      %v68 = vld [vmem:[#allocation2] sm:$0xff]
      %69 = vadd.xlane.f32.xlu0 %v68
      %v70 = vpop.xlane.xlu0 %69
      %v71 = vrot.slane %v70, 4
      %v72 = vadd.f32 %v70, %v71
      %v73 = vrot.slane %v72, 2
      %v74 = vadd.f32 %v72, %v73
      %v75 = vrot.slane %v74, 1
      %v76 = vadd.f32 %v74, %v75
      %s77 = vtos %v76
      %s78 = sld [smem:[#allocation3]]
      %s79 = sadd.f32 %s77, %s78
      %s80 = smul.f32 %s79, 0.00048828125
      %s81 = sadd.f32 %s80, 1e-06
      %v82 = vstv %s81
      %v83 = vrsqrt.pop %v82
      %v84 = vmul.f32 %v83, %v82
      %v85 = vmul.f32 %v84, %v83
      %v86 = vmul.f32 0.5, %v85
      %v87 = vsub.f32 1.5, %v86
      %v88 = vmul.f32 %v83, %v87
      %v89 = vmul.f32 %v82, %v88
      %vm90 = vcmp.eq.f32.partialorder %v82, inf
      %v91 = vsel %vm90, %v82, %v89
      %vm92 = vcmp.eq.f32.partialorder %v82, 0.0
      %v93 = vand.u32 %v82, 2147483648
      %v94 = vsel %vm92, %v93, %v91
      %s95 = vtos %v94
      %s96 = scalar_lea.smem [#allocation9], 0
      %97 = sst [smem:[%s96]] %s95
    $region29: #{tpu_custom_call.1} parent=1 // pred_fallthru
      _
    // Predicated region
    $region30: #{tpu_custom_call.1} parent=1 // pred_check
      _
    $region31: #{tpu_custom_call.1} parent=1 // pred_check_branch
      %99 = sbr.rel (0) target = $region33
    $region32: #{tpu_custom_call.1} parent=1 // pred_region
      %101 = vsyncadd [#allocation6], 0
      %s103 = sshll.u32 %s3, 4
      %s104 = int_to_ptr.hbm [resolvable:$true] %s103
      %106 = dma.smem_to_hbm [#allocation9], 16, %s104, [#allocation6]
    $region33: #{tpu_custom_call.1} parent=1 // pred_fallthru
      _
    // Predicated region
    $region34: #{tpu_custom_call.1} parent=1 // pred_check
      _
    $region35: #{tpu_custom_call.1} parent=1 // pred_check_branch
      %108 = sbr.rel (0) target = $region37
    $region36: #{tpu_custom_call.1} parent=1 // pred_region
      %110 = dma.done [#allocation6], 16
    $region37: #{tpu_custom_call.1} parent=1 // pred_fallthru
      _
    %111 = sfence
    %112 = vsyncpa [#allocation5], 1
    %113 = vsyncpa [#allocation8], 1
    %114 = vsyncpa [#allocation6], 1

</llo_original>
